<compile_context>
chip_gen: v7x
topology: tpu7x:2x2x1
jax: 0.10.0
libtpu: 0.0.40
codegen_flags: <defaults>
</compile_context>

<pallas_src>
import functools

import numpy as np
import jax
import jax.numpy as jnp
from jax import lax
from jax.experimental import pallas as pl
from jax.experimental.pallas import tpu as pltpu


def _deconv_subpixel_kernel(xp_ref, w_ref, b_ref, o_ref, *,
                            U, Hq, Wq, CIN, apply_relu):
    """One batch element: register im2col + a single MXU matmul.

    xp_ref: (Hp, Wp*CIN)               compact halo-padded input, lane-flat (bf16)
    w_ref:  (U*U*Wq*CIN, Wq*s*s*COUT)  Wq-block-diagonal packed weight (bf16)
    b_ref:  (1, Wq*s*s*COUT)           bias replicated per (w, phase) (f32)
    o_ref:  (Hq, Wq*s*s*COUT)          phase-packed, lane-dense output (bf16)
    """
    x = xp_ref[...]                                   # (Hp, Wp*CIN)
    wc = Wq * CIN
    # Register im2col: U*U shifted views concatenated along the lane axis.
    # No VMEM scratch, no reshapes, no masked narrow stores.
    slices = [x[uh:uh + Hq, uw * CIN:uw * CIN + wc]
              for uh in range(U) for uw in range(U)]
    a2 = jnp.concatenate(slices, axis=-1)             # (Hq, U*U*Wq*CIN)

    # Single MXU contraction, f32 accumulation.
    acc = jnp.dot(a2, w_ref[...], preferred_element_type=jnp.float32)

    # f32 epilogue (v5e-safe VPU path): bias once, ReLU once, cast on store.
    acc = acc + b_ref[...]
    if apply_relu:
        acc = jnp.maximum(acc, 0.0)
    o_ref[...] = acc.astype(o_ref.dtype)


def deconv_block_forward(x_nchw, weight, bias, *, stride=2, padding=1,
                         output_padding=0, with_bn=False, with_activation=True):
    """Forward pass of deconvBlock with its default flags (no BN, ReLU)."""
    # TODO(synk): with_bn=True (training-mode BatchNorm2d batch statistics) and
    # the PReLU branch (act_type != 'R') are not implemented; for inference BN,
    # fold scale/shift into `weight`/`bias` here *before* the bf16 weight cast.
    assert not with_bn, "BatchNorm branch not implemented (module default is off)"

    N, CIN, H, W = x_nchw.shape
    CIN_w, COUT, K, K2 = weight.shape
    assert K == K2 and CIN_w == CIN
    s, p, op = int(stride), int(padding), int(output_padding)

    OH = (H - 1) * s - 2 * p + K + op
    OW = (W - 1) * s - 2 * p + K + op
    Hq = -(-OH // s)                       # per-phase output rows
    Wq = -(-OW // s)                       # per-phase output cols
    PH = s * s

    # Sub-pixel decomposition: output index oh = s*q + r receives
    #   x[q + a - d] * W[..., s*d + b],  (a, b) = divmod(r + p, s),
    # for every d >= 0 with s*d + b < K.
    taps = []                              # (phase r, input offset o, kernel idx k)
    for r in range(s):
        a, b = divmod(r + p, s)
        d = 0
        while s * d + b < K:
            taps.append((r, a - d, s * d + b))
            d += 1
    offs = [o for (_, o, _) in taps]
    o_min, o_max = min(offs), max(offs)
    pad_lo = max(0, -o_min)
    U = o_max + pad_lo + 1                 # unified footprint width (per dim)
    pad_hi_h = max(0, (Hq - 1) + o_max - (H - 1))
    pad_hi_w = max(0, (Wq - 1) + o_max - (W - 1))

    # NCHW -> NHWC, bf16, tiny halo pad (no zero-dilated input), and flatten
    # (W, CIN) onto the lane axis so the kernel's input block is lane-dense.
    x = jnp.transpose(x_nchw, (0, 2, 3, 1)).astype(jnp.bfloat16)
    xp = jnp.pad(x, ((0, 0), (pad_lo, pad_hi_h), (pad_lo, pad_hi_w), (0, 0)))
    Hp = H + pad_lo + pad_hi_h
    Wp = W + pad_lo + pad_hi_w
    xp_flat = xp.reshape(N, Hp, Wp * CIN)

    # One-hot tap matrices (static) -> packed per-phase weight via ONE einsum,
    # then a Wq-Kronecker expansion so the output keeps Wq on the lane axis:
    #   W2[(uu*Wq + w)*CIN + ci, (w*PH + ph)*COUT + co] = wp6[uh,uw,ci,rh,rw,co]
    m1 = np.zeros((U, s, K), np.float32)   # m1[u, r, k] = 1 iff phase r taps (u, k)
    for (r, o, k) in taps:
        m1[o + pad_lo, r, k] = 1.0
    m1 = jnp.asarray(m1)
    w_khw = jnp.transpose(weight, (2, 3, 0, 1)).astype(jnp.float32)   # (K,K,CIN,COUT)
    wp6 = jnp.einsum('uak,vbl,klio->uviabo', m1, m1, w_khw)           # (U,U,CIN,s,s,COUT)
    wp4 = wp6.reshape(U * U, CIN, PH, COUT)
    eye_w = jnp.eye(Wq, dtype=jnp.float32)
    w2 = jnp.einsum('xy,uico->uxiyco', eye_w, wp4)
    w2 = w2.reshape(U * U * Wq * CIN, Wq * PH * COUT).astype(jnp.bfloat16)
    b2 = jnp.tile(bias.astype(jnp.float32), Wq * PH).reshape(1, Wq * PH * COUT)

    kernel = functools.partial(_deconv_subpixel_kernel, U=U, Hq=Hq, Wq=Wq,
                               CIN=CIN, apply_relu=with_activation)

    out_phased = pl.pallas_call(
        kernel,
        out_shape=jax.ShapeDtypeStruct((N, Hq, Wq * PH * COUT), jnp.bfloat16),
        grid=(N,),
        in_specs=[
            pl.BlockSpec((None, Hp, Wp * CIN), lambda n: (n, 0, 0)),
            # Constant block indices: weight/bias tiles stay resident in VMEM.
            pl.BlockSpec((U * U * Wq * CIN, Wq * PH * COUT), lambda n: (0, 0)),
            pl.BlockSpec((1, Wq * PH * COUT), lambda n: (0, 0)),
        ],
        out_specs=pl.BlockSpec((None, Hq, Wq * PH * COUT), lambda n: (n, 0, 0)),
        compiler_params=pltpu.CompilerParams(
            dimension_semantics=("parallel",)),
    )(xp_flat, w2, b2)

    # Interleave phases back to full resolution, crop, and return NCHW f32.
    out = out_phased.reshape(N, Hq, Wq, s, s, COUT)
    out = jnp.transpose(out, (0, 1, 3, 2, 4, 5)).reshape(N, Hq * s, Wq * s, COUT)
    out = out[:, :OH, :OW, :]
    return jnp.transpose(out, (0, 3, 1, 2)).astype(jnp.float32)


if __name__ == "__main__":
    key = jax.random.PRNGKey(0)
    kx, kw, kb = jax.random.split(key, 3)

    N, CIN, COUT, H, W, K = 2, 4, 4, 16, 16, 3
    x = jax.random.normal(kx, (N, CIN, H, W), dtype=jnp.float32)
    # ConvTranspose2d weight shape: (in_channels, out_channels, kH, kW)
    weight = jax.random.normal(kw, (CIN, COUT, K, K), dtype=jnp.float32) * 0.1
    bias = jax.random.normal(kb, (COUT,), dtype=jnp.float32) * 0.1

    out = deconv_block_forward(x, weight, bias)
    out = jax.block_until_ready(out)
    assert out.shape == (N, COUT, 2 * H - 1, 2 * W - 1), out.shape

    # Reference: XLA dilated conv == ConvTranspose2d, then bias + ReLU.
    # Inputs rounded to bf16 to match the kernel's MXU input precision, and the
    # reference is rounded through bf16 to match the kernel's bf16 output store.
    xr = x.astype(jnp.bfloat16).astype(jnp.float32)
    wr = weight.astype(jnp.bfloat16).astype(jnp.float32)
    w_flip = jnp.transpose(wr[:, :, ::-1, ::-1], (1, 0, 2, 3))  # (COUT,CIN,K,K)
    ref = lax.conv_general_dilated(
        xr, w_flip, window_strides=(1, 1), padding=[(1, 1), (1, 1)],
        lhs_dilation=(2, 2), dimension_numbers=("NCHW", "OIHW", "NCHW"),
        precision=lax.Precision.HIGHEST)
    ref = jnp.maximum(ref + bias[None, :, None, None], 0.0)
    ref = ref.astype(jnp.bfloat16).astype(jnp.float32)

    if not jnp.allclose(out, ref, atol=2e-2, rtol=2e-2):
        err = jnp.max(jnp.abs(out - ref))
        raise AssertionError(f"Pallas deconvBlock mismatch, max abs err={err}")

    print("KERNEL_OK")
</pallas_src>

<mosaic_0001>
module attributes {stable_mosaic.version = 11 : i64} {
  func.func @_deconv_subpixel_kernel(%arg0: i32, %arg1: memref<1x17x68xbf16, #tpu.memory_space<vmem>>, %arg2: memref<256x256xbf16, #tpu.memory_space<vmem>>, %arg3: memref<1x256xf32, #tpu.memory_space<vmem>>, %arg4: memref<1x16x256xbf16, #tpu.memory_space<vmem>>) attributes {dimension_semantics = [#tpu.dimension_semantics<parallel>], iteration_bounds = array<i64: 2>, scalar_prefetch = 0 : i64, scratch_operands = 0 : i64, tpu.core_type = #tpu.core_type<tc>, window_params = [{transform_indices = @transform_0, window_bounds = array<i64: 1, 17, 68>}, {pipeline_mode = #tpu.pipeline_mode<synchronous>, transform_indices = @transform_1, window_bounds = array<i64: 256, 256>}, {pipeline_mode = #tpu.pipeline_mode<synchronous>, transform_indices = @transform_2, window_bounds = array<i64: 1, 256>}, {transform_indices = @transform_3, window_bounds = array<i64: 1, 16, 256>}]} {
    %c0 = arith.constant 0 : index
    %c0_0 = arith.constant 0 : index
    %c0_1 = arith.constant 0 : index
    %0 = vector.load %arg1[%c0, %c0_0, %c0_1] : memref<1x17x68xbf16, #tpu.memory_space<vmem>>, vector<1x17x68xbf16>
    %1 = vector.shape_cast %0 : vector<1x17x68xbf16> to vector<17x68xbf16>
    %2 = vector.extract_strided_slice %1 {offsets = [0, 0], sizes = [16, 64], strides = [1, 1]} : vector<17x68xbf16> to vector<16x64xbf16>
    %3 = vector.extract_strided_slice %1 {offsets = [0, 4], sizes = [16, 64], strides = [1, 1]} : vector<17x68xbf16> to vector<16x64xbf16>
    %4 = vector.extract_strided_slice %1 {offsets = [1, 0], sizes = [16, 64], strides = [1, 1]} : vector<17x68xbf16> to vector<16x64xbf16>
    %5 = vector.extract_strided_slice %1 {offsets = [1, 4], sizes = [16, 64], strides = [1, 1]} : vector<17x68xbf16> to vector<16x64xbf16>
    %6 = tpu.concatenate %2, %3, %4, %5 in 1 : vector<16x64xbf16>, vector<16x64xbf16>, vector<16x64xbf16>, vector<16x64xbf16> -> vector<16x256xbf16>
    %c0_2 = arith.constant 0 : index
    %c0_3 = arith.constant 0 : index
    %7 = vector.load %arg2[%c0_2, %c0_3] : memref<256x256xbf16, #tpu.memory_space<vmem>>, vector<256x256xbf16>
    %cst = arith.constant dense<0.000000e+00> : vector<16x256xf32>
    %8 = tpu.matmul %6, %7, %cst {dimension_numbers = #tpu.dot_dimension_numbers<[1], [0], [0], [1], [0, 0, 1, 1], [], []>} : vector<16x256xbf16>, vector<256x256xbf16>, vector<16x256xf32> -> vector<16x256xf32>
    %c0_4 = arith.constant 0 : index
    %c0_5 = arith.constant 0 : index
    %9 = vector.load %arg3[%c0_4, %c0_5] : memref<1x256xf32, #tpu.memory_space<vmem>>, vector<1x256xf32>
    %10 = vector.broadcast %9 : vector<1x256xf32> to vector<16x256xf32>
    %11 = arith.addf %8, %10 : vector<16x256xf32>
    %cst_6 = arith.constant 0.000000e+00 : f32
    %12 = vector.broadcast %cst_6 : f32 to vector<16x256xf32>
    %13 = arith.maximumf %11, %12 : vector<16x256xf32>
    %14 = arith.truncf %13 : vector<16x256xf32> to vector<16x256xbf16>
    %c0_7 = arith.constant 0 : index
    %c0_8 = arith.constant 0 : index
    %c0_9 = arith.constant 0 : index
    %15 = vector.load %arg4[%c0_7, %c0_8, %c0_9] : memref<1x16x256xbf16, #tpu.memory_space<vmem>>, vector<1x16x256xbf16>
    %16 = vector.shape_cast %15 : vector<1x16x256xbf16> to vector<16x256xbf16>
    %17 = vector.shape_cast %14 : vector<16x256xbf16> to vector<1x16x256xbf16>
    tpu.vector_store %arg4[%c0_7, %c0_8, %c0_9], %17 {strides = array<i32>} : memref<1x16x256xbf16, #tpu.memory_space<vmem>>, vector<1x16x256xbf16>,
    return
  }
  func.func @transform_0(%arg0: i32) -> (i32, i32, i32) {
    %c0_i32 = arith.constant 0 : i32
    %c0_i32_0 = arith.constant 0 : i32
    %c0_i32_1 = arith.constant 0 : i32
    return %arg0, %c0_i32, %c0_i32_0 : i32, i32, i32
  }
  func.func @transform_1(%arg0: i32) -> (i32, i32) {
    %c0_i32 = arith.constant 0 : i32
    %c0_i32_0 = arith.constant 0 : i32
    %c0_i32_1 = arith.constant 0 : i32
    return %c0_i32, %c0_i32_0 : i32, i32
  }
  func.func @transform_2(%arg0: i32) -> (i32, i32) {
    %c0_i32 = arith.constant 0 : i32
    %c0_i32_0 = arith.constant 0 : i32
    %c0_i32_1 = arith.constant 0 : i32
    return %c0_i32, %c0_i32_0 : i32, i32
  }
  func.func @transform_3(%arg0: i32) -> (i32, i32, i32) {
    %c0_i32 = arith.constant 0 : i32
    %c0_i32_0 = arith.constant 0 : i32
    %c0_i32_1 = arith.constant 0 : i32
    return %arg0, %c0_i32, %c0_i32_0 : i32, i32, i32
  }
}

</mosaic_0001>

<llo_original>
// kernel: tpu_custom_call.1
$region0: #{tpu_custom_call.1}
  #allocation0 [shape = 'u32[]', space=smem, size = 0x4, offset = 0x4, fixed_abs, tag = 'smem constant byte address 0x4 - core index']
  #allocation1 [shape = 'u32[144,128]{1,0:T(1,128)}', space=vmem, size = 0x12000, scoped, tag = 'internal scratch']
  %s0 = inlined_call_operand.vmem [shape: bf16[2,17,68], index: 0, kind: input, shape index: {}]
  %s1 = inlined_call_operand.hbm [shape: bf16[256,256], index: 1, kind: input, shape index: {}]
  %s2 = inlined_call_operand.vmem [shape: f32[1,256], index: 2, kind: input, shape index: {}]
  %s3 = inlined_call_operand.hbm [shape: bf16[2,16,256], index: 3, kind: output, shape index: {}]
  %s4 = sld [smem:[#allocation0]]
  $region49: #{tpu_custom_call.1} parent=0
    _
  %s6 = ssub.s32 1, %s4
  %s7 = scalar_select 0, %s6, %s4
  $region1: #{tpu_custom_call.1} parent=0
    #allocation2 [shape = 'u8[131072]{0}', space=vmem, size = 0x20000, scoped, tag = 'input window, operand 1, single buffered']
    #allocation3 [shape = 's32[2]{0}', space=sflag, size = 0x8, scoped, tag = 'scoped memory for tpu_custom_call.1']
    #allocation4 [shape = 's32[2]{0}', space=sflag, size = 0x8, scoped, tag = 'scoped memory for tpu_custom_call.1']
    #allocation5 [shape = 'u8[16384]{0}', space=vmem, size = 0x4000, scoped, tag = 'output window, operand 0']
    %8 = vsyncpa [#allocation3], 0
    %9 = vsyncpa [#allocation4], 0
    %s10 = scalar_lea.sflag [#allocation4], 1
    %11 = vsyncpa %s10, 0
    loop: start=0, step=1, limit=4
    $region2: #{tpu_custom_call.1} parent=1 // loop_pre_header
      _
    $region3: #{tpu_custom_call.1} parent=1 // loop_header
      %s13 = sphi 0, %s17
      %p14 = scmp.ge.s32.totalorder %s13, 4
      %s23 = sphi 0, %s25
      %s26 = sphi 0, %s23
      %s27 = sphi 0, %s26
      %s43 = sphi 0, %s27
      %s47 = sphi 0, %s47
      %s49 = sphi 0, %s47
      %s50 = sphi 0, %s49
      %s64 = sphi 0, %s50
      %s68 = sphi 0, %s68
      %s70 = sphi 0, %s68
      %s71 = sphi 0, %s70
      %s85 = sphi 0, %s71
      %s91 = sphi 0, %s93
      %s94 = sphi 0, %s91
      %s95 = sphi 0, %s94
      %s111 = sphi 0, %s95
    $region4: #{tpu_custom_call.1} parent=1 // loop_header_branch
      %16 = sbr.rel (%p14) target = $region8
    $region5: #{tpu_custom_call.1} parent=1 // loop_body
      %s18 = ssub.s32 %s13, 1
      %s19 = ssub.s32 %s13, 2
      %s20 = sadd.s32 %s13, 1
      %s21 = ssub.s32 %s13, %s20
      %p22 = scmp.eq.s32.totalorder %s21, 0
      %s24 = sadd.s32 %s23, 1
      %s25 = scalar_select %p22, %s23, %s24
      %p28 = pneg %p22
      %p29 = scmp.eq.s32.totalorder %s13, 1
      %p30 = por %p28, %p29
      %p31 = scmp.ne.s32.totalorder %s23, %s26
      %p32 = scmp.eq.s32.totalorder %s13, 0
      %p33 = por %p31, %p32
      %p34 = scmp.ne.s32.totalorder %s23, %s26
      %p35 = scmp.eq.s32.totalorder %s18, 1
      %p36 = por %p34, %p35
      %p37 = scmp.ne.s32.totalorder %s26, %s27
      %p38 = scmp.eq.s32.totalorder %s18, 0
      %p39 = por %p37, %p38
      %p40 = scmp.ne.s32.totalorder %s26, %s27
      %p41 = scmp.eq.s32.totalorder %s19, 1
      %p42 = por %p40, %p41
      %p44 = scmp.ne.s32.totalorder %s27, %s43
      %p45 = scmp.eq.s32.totalorder %s19, 0
      %p46 = por %p44, %p45
      %s48 = sadd.s32 %s47, 1
      %p51 = scmp.eq.s32.totalorder %s13, 1
      %p52 = scmp.ne.s32.totalorder %s47, %s49
      %p53 = scmp.eq.s32.totalorder %s13, 0
      %p54 = por %p52, %p53
      %p55 = scmp.ne.s32.totalorder %s47, %s49
      %p56 = scmp.eq.s32.totalorder %s18, 1
      %p57 = por %p55, %p56
      %p58 = scmp.ne.s32.totalorder %s49, %s50
      %p59 = scmp.eq.s32.totalorder %s18, 0
      %p60 = por %p58, %p59
      %p61 = scmp.ne.s32.totalorder %s49, %s50
      %p62 = scmp.eq.s32.totalorder %s19, 1
      %p63 = por %p61, %p62
      %p65 = scmp.ne.s32.totalorder %s50, %s64
      %p66 = scmp.eq.s32.totalorder %s19, 0
      %p67 = por %p65, %p66
      %s69 = sadd.s32 %s68, 1
      %p72 = scmp.eq.s32.totalorder %s13, 1
      %p73 = scmp.ne.s32.totalorder %s68, %s70
      %p74 = scmp.eq.s32.totalorder %s13, 0
      %p75 = por %p73, %p74
      %p76 = scmp.ne.s32.totalorder %s68, %s70
      %p77 = scmp.eq.s32.totalorder %s18, 1
      %p78 = por %p76, %p77
      %p79 = scmp.ne.s32.totalorder %s70, %s71
      %p80 = scmp.eq.s32.totalorder %s18, 0
      %p81 = por %p79, %p80
      %p82 = scmp.ne.s32.totalorder %s70, %s71
      %p83 = scmp.eq.s32.totalorder %s19, 1
      %p84 = por %p82, %p83
      %p86 = scmp.ne.s32.totalorder %s71, %s85
      %p87 = scmp.eq.s32.totalorder %s19, 0
      %p88 = por %p86, %p87
      %s89 = ssub.s32 %s13, %s20
      %p90 = scmp.eq.s32.totalorder %s89, 0
      %s92 = sadd.s32 %s91, 1
      %s93 = scalar_select %p90, %s91, %s92
      %p96 = pneg %p90
      %p97 = scmp.eq.s32.totalorder %s13, 1
      %p98 = por %p96, %p97
      %p99 = scmp.ne.s32.totalorder %s91, %s94
      %p100 = scmp.eq.s32.totalorder %s13, 0
      %p101 = por %p99, %p100
      %p102 = scmp.ne.s32.totalorder %s91, %s94
      %p103 = scmp.eq.s32.totalorder %s18, 1
      %p104 = por %p102, %p103
      %p105 = scmp.ne.s32.totalorder %s94, %s95
      %p106 = scmp.eq.s32.totalorder %s18, 0
      %p107 = por %p105, %p106
      %p108 = scmp.ne.s32.totalorder %s94, %s95
      %p109 = scmp.eq.s32.totalorder %s19, 1
      %p110 = por %p108, %p109
      %p112 = scmp.ne.s32.totalorder %s95, %s111
      %p113 = scmp.eq.s32.totalorder %s19, 0
      %p114 = por %p112, %p113
      %p115 = scmp.le.s32.totalorder 1, %s13
      %p116 = scmp.lt.s32.totalorder %s13, 3
      %p117 = pnand %p115, %p116
      %p118 = pneg %p117
      // Predicated region
      $region9: #{tpu_custom_call.1} parent=5 // pred_check
        _
      $region10: #{tpu_custom_call.1} parent=5 // pred_check_branch
        %120 = sbr.rel (%p117) target = $region12
      $region11: #{tpu_custom_call.1} parent=5 // pred_region
        %s121 = ssub.s32 %s13, 1
        // Predicated region
        $region13: #{tpu_custom_call.1} parent=11 // pred_check
          %p122 = pneg %p60
        $region14: #{tpu_custom_call.1} parent=11 // pred_check_branch
          %124 = sbr.rel (%p122) target = $region16
        $region15: #{tpu_custom_call.1} parent=11 // pred_region
          %s126 = ssub.s32 4096, 4096
          %127 = vsyncadd [#allocation3], %s126
          %s128 = sshll.u32 [#allocation2], 4
          %s129 = int_to_ptr.vmem [resolvable:$true] %s128
          %134 = dma.hbm_to_vmem [thread:$0]  %s1, 4096, %s129, [#allocation3], 128, 128, 8
        $region16: #{tpu_custom_call.1} parent=11 // pred_fallthru
          _
        // Predicated region
        $region17: #{tpu_custom_call.1} parent=11 // pred_check
          %p135 = pneg %p81
        $region18: #{tpu_custom_call.1} parent=11 // pred_check_branch
          %137 = sbr.rel (%p135) target = $region20
        $region19: #{tpu_custom_call.1} parent=11 // pred_region
          _
        $region20: #{tpu_custom_call.1} parent=11 // pred_fallthru
          _
      $region12: #{tpu_custom_call.1} parent=5 // pred_fallthru
        _
      %p138 = scmp.lt.s32.totalorder %s13, 2
      // Predicated region
      $region21: #{tpu_custom_call.1} parent=5 // pred_check
        %p139 = pneg %p138
      $region22: #{tpu_custom_call.1} parent=5 // pred_check_branch
        %141 = sbr.rel (%p139) target = $region24
      $region23: #{tpu_custom_call.1} parent=5 // pred_region
        // Predicated region
        $region25: #{tpu_custom_call.1} parent=23 // pred_check
          %p142 = pneg %p33
        $region26: #{tpu_custom_call.1} parent=23 // pred_check_branch
          %144 = sbr.rel (%p142) target = $region28
        $region27: #{tpu_custom_call.1} parent=23 // pred_region
          %p145 = scmp.lt.s32.totalorder %s13, 1
          %s146 = scalar_select %p145, %s13, 1
          %s147 = smul.addr %s146, 3
          %s148 = smul.addr %s147, 4
          %s149 = scalar_lea.vmem %s0, %s148
        $region28: #{tpu_custom_call.1} parent=23 // pred_fallthru
          _
      $region24: #{tpu_custom_call.1} parent=5 // pred_fallthru
        _
      %p150 = scmp.le.s32.totalorder 1, %s13
      %p151 = scmp.lt.s32.totalorder %s13, 3
      %p152 = pnand %p150, %p151
      %p153 = pneg %p152
      // Predicated region
      $region29: #{tpu_custom_call.1} parent=5 // pred_check
        _
      $region30: #{tpu_custom_call.1} parent=5 // pred_check_branch
        %155 = sbr.rel (%p152) target = $region32
      $region31: #{tpu_custom_call.1} parent=5 // pred_region
        %s156 = ssub.s32 %s13, 1
        // Predicated region
        $region33: #{tpu_custom_call.1} parent=31 // pred_check
          %p157 = pneg %p60
        $region34: #{tpu_custom_call.1} parent=31 // pred_check_branch
          %159 = sbr.rel (%p157) target = $region36
        $region35: #{tpu_custom_call.1} parent=31 // pred_region
          %160 = dma.done [#allocation3], 4096
        $region36: #{tpu_custom_call.1} parent=31 // pred_fallthru
          _
        %p161 = scmp.lt.s32.totalorder %s18, 1
        %s162 = scalar_select %p161, %s18, 1
        %s163 = smul.addr %s162, 3
        %s164 = smul.addr %s163, 4
        %s165 = scalar_lea.vmem %s0, %s164
        %p166 = pneg %p39
        %p167 = pneg %p36
        %p168 = pneg %p60
        %p169 = pneg %p57
        %p170 = pneg %p81
        %p171 = pneg %p78
        %p172 = pneg %p107
        %p173 = pneg %p104
        %s174 = sand.u32 %s94, 1
        %s175 = scalar_lea.sflag [#allocation4], %s174
        %s176 = sand.u32 %s94, 1
        %s177 = smul.addr %s176, 16
        %s178 = scalar_lea.vmem [#allocation5], %s177
        %p179 = scmp.lt.s32.totalorder %s18, 1
        %s180 = scalar_select %p179, %s18, 1
        %s181 = smul.addr %s180, 3
        %s182 = smul.addr %s181, 4
        %s183 = scalar_lea.vmem %s0, %s182
        %v184 = vld [vmem:[%s183] sm:$0xf]
        %v185 = vld [vmem:[%s183 + $0x4] sm:$0xf]
        %v186 = vld [vmem:[%s183 + $0x8] sm:$0x1]
        %v189 = vunpack.c.l.b16 %v184
        %v190 = vunpack.c.l.b16 %v185
        %v191 = vpack.c.b16 %v190, %v189
        %192 = vrot.lane.b32.xlu0 %v191, 60
        %v193 = vpop.permute.xlu0 %192
        %v195 = vunpack.c.l.b16 %v186
        %v196 = vpack.c.b16 %v195, %v195
        %vm197 = vsmask.f32 7424
        %v199 = vshrl.u32 %v191, 16
        %v201 = vshll.u32 %v191, 16
        %v203 = vrot.slane %v201, 1
        %v204 = vor.u32 %v199, %v203
        %v206 = vshll.u32 %v196, 16
        %v208 = vrot.slane %v206, 1
        %v209 = vsel %vm197, %v204, %v208
        %210 = vrot.lane.b32.xlu0 %v209, 60
        %v211 = vpop.permute.xlu0 %210
        %vm212 = vcmask 523264
        %v214 = vsel %vm212, %v191, %v193
        %v218 = vsel %vm212, %v209, %v211
        %v220 = vld [vmem:[#allocation2] sm:$0xff]
        %v221 = vld [vmem:[#allocation2 + $0x8] sm:$0xff]
        %v222 = vld [vmem:[#allocation2 + $0x10] sm:$0xff]
        %v223 = vld [vmem:[#allocation2 + $0x18] sm:$0xff]
        %v224 = vld [vmem:[#allocation2 + $0x20] sm:$0xff]
        %v225 = vld [vmem:[#allocation2 + $0x28] sm:$0xff]
        %v226 = vld [vmem:[#allocation2 + $0x30] sm:$0xff]
        %v227 = vld [vmem:[#allocation2 + $0x38] sm:$0xff]
        %v228 = vld [vmem:[#allocation2 + $0x40] sm:$0xff]
        %v229 = vld [vmem:[#allocation2 + $0x48] sm:$0xff]
        %v230 = vld [vmem:[#allocation2 + $0x50] sm:$0xff]
        %v231 = vld [vmem:[#allocation2 + $0x58] sm:$0xff]
        %v232 = vld [vmem:[#allocation2 + $0x60] sm:$0xff]
        %v233 = vld [vmem:[#allocation2 + $0x68] sm:$0xff]
        %v234 = vld [vmem:[#allocation2 + $0x70] sm:$0xff]
        %v235 = vld [vmem:[#allocation2 + $0x78] sm:$0xff]
        %v236 = vld [vmem:[#allocation2 + $0x80] sm:$0xff]
        %v237 = vld [vmem:[#allocation2 + $0x88] sm:$0xff]
        %v238 = vld [vmem:[#allocation2 + $0x90] sm:$0xff]
        %v239 = vld [vmem:[#allocation2 + $0x98] sm:$0xff]
        %v240 = vld [vmem:[#allocation2 + $0xa0] sm:$0xff]
        %v241 = vld [vmem:[#allocation2 + $0xa8] sm:$0xff]
        %v242 = vld [vmem:[#allocation2 + $0xb0] sm:$0xff]
        %v243 = vld [vmem:[#allocation2 + $0xb8] sm:$0xff]
        %v244 = vld [vmem:[#allocation2 + $0xc0] sm:$0xff]
        %v245 = vld [vmem:[#allocation2 + $0xc8] sm:$0xff]
        %v246 = vld [vmem:[#allocation2 + $0xd0] sm:$0xff]
        %v247 = vld [vmem:[#allocation2 + $0xd8] sm:$0xff]
        %v248 = vld [vmem:[#allocation2 + $0xe0] sm:$0xff]
        %v249 = vld [vmem:[#allocation2 + $0xe8] sm:$0xff]
        %v250 = vld [vmem:[#allocation2 + $0xf0] sm:$0xff]
        %v251 = vld [vmem:[#allocation2 + $0xf8] sm:$0xff]
        %v252 = vld [vmem:[%s2] sm:$0x3]
        %v254 = vlaneseq
        %v255 = vshrl.u32 %v254, 7
        %v256 = vsub.s32 0, %v255
        %v257 = vrot.slane %v252, %v256
        %v258 = vlaneseq
        %v259 = vshrl.u32 %v258, 7
        %v260 = vsub.s32 1, %v259
        %v261 = vrot.slane %v252, %v260
        %v296 = vunpack.c.l.b16 %v220
        %v297 = vunpack.c.h.b16 %v220
        %v298 = vunpack.c.l.b16 %v221
        %v299 = vunpack.c.h.b16 %v221
        %v300 = vunpack.c.l.b16 %v222
        %v301 = vunpack.c.h.b16 %v222
        %v302 = vunpack.c.l.b16 %v223
        %v303 = vunpack.c.h.b16 %v223
        %v304 = vunpack.c.l.b16 %v224
        %v305 = vunpack.c.h.b16 %v224
        %v306 = vunpack.c.l.b16 %v225
        %v307 = vunpack.c.h.b16 %v225
        %v308 = vunpack.c.l.b16 %v226
        %v309 = vunpack.c.h.b16 %v226
        %v310 = vunpack.c.l.b16 %v227
        %v311 = vunpack.c.h.b16 %v227
        %v312 = vunpack.c.l.b16 %v228
        %v313 = vunpack.c.h.b16 %v228
        %v314 = vunpack.c.l.b16 %v229
        %v315 = vunpack.c.h.b16 %v229
        %v316 = vunpack.c.l.b16 %v230
        %v317 = vunpack.c.h.b16 %v230
        %v318 = vunpack.c.l.b16 %v231
        %v319 = vunpack.c.h.b16 %v231
        %v320 = vunpack.c.l.b16 %v232
        %v321 = vunpack.c.h.b16 %v232
        %v322 = vunpack.c.l.b16 %v233
        %v323 = vunpack.c.h.b16 %v233
        %v324 = vunpack.c.l.b16 %v234
        %v325 = vunpack.c.h.b16 %v234
        %v326 = vunpack.c.l.b16 %v235
        %v327 = vunpack.c.h.b16 %v235
        %v328 = vunpack.c.l.b16 %v236
        %v329 = vunpack.c.h.b16 %v236
        %v330 = vunpack.c.l.b16 %v237
        %v331 = vunpack.c.h.b16 %v237
        %v332 = vunpack.c.l.b16 %v238
        %v333 = vunpack.c.h.b16 %v238
        %v334 = vunpack.c.l.b16 %v239
        %v335 = vunpack.c.h.b16 %v239
        %v336 = vunpack.c.l.b16 %v240
        %v337 = vunpack.c.h.b16 %v240
        %v338 = vunpack.c.l.b16 %v241
        %v339 = vunpack.c.h.b16 %v241
        %v340 = vunpack.c.l.b16 %v242
        %v341 = vunpack.c.h.b16 %v242
        %v342 = vunpack.c.l.b16 %v243
        %v343 = vunpack.c.h.b16 %v243
        %v344 = vunpack.c.l.b16 %v244
        %v345 = vunpack.c.h.b16 %v244
        %v346 = vunpack.c.l.b16 %v245
        %v347 = vunpack.c.h.b16 %v245
        %v348 = vunpack.c.l.b16 %v246
        %v349 = vunpack.c.h.b16 %v246
        %v350 = vunpack.c.l.b16 %v247
        %v351 = vunpack.c.h.b16 %v247
        %v352 = vunpack.c.l.b16 %v248
        %v353 = vunpack.c.h.b16 %v248
        %v354 = vunpack.c.l.b16 %v249
        %v355 = vunpack.c.h.b16 %v249
        %v356 = vunpack.c.l.b16 %v250
        %v357 = vunpack.c.h.b16 %v250
        %v358 = vunpack.c.l.b16 %v251
        %v359 = vunpack.c.h.b16 %v251
        %v360 = vpack.c.b16 %v298, %v296
        %v361 = vpack.c.b16 %v299, %v297
        %v362 = vpack.c.b16 %v302, %v300
        %v363 = vpack.c.b16 %v303, %v301
        %v364 = vpack.c.b16 %v306, %v304
        %v365 = vpack.c.b16 %v307, %v305
        %v366 = vpack.c.b16 %v310, %v308
        %v367 = vpack.c.b16 %v311, %v309
        %v368 = vpack.c.b16 %v314, %v312
        %v369 = vpack.c.b16 %v315, %v313
        %v370 = vpack.c.b16 %v318, %v316
        %v371 = vpack.c.b16 %v319, %v317
        %v372 = vpack.c.b16 %v322, %v320
        %v373 = vpack.c.b16 %v323, %v321
        %v374 = vpack.c.b16 %v326, %v324
        %v375 = vpack.c.b16 %v327, %v325
        %v376 = vpack.c.b16 %v330, %v328
        %v377 = vpack.c.b16 %v331, %v329
        %v378 = vpack.c.b16 %v334, %v332
        %v379 = vpack.c.b16 %v335, %v333
        %v380 = vpack.c.b16 %v338, %v336
        %v381 = vpack.c.b16 %v339, %v337
        %v382 = vpack.c.b16 %v342, %v340
        %v383 = vpack.c.b16 %v343, %v341
        %v384 = vpack.c.b16 %v346, %v344
        %v385 = vpack.c.b16 %v347, %v345
        %v386 = vpack.c.b16 %v350, %v348
        %v387 = vpack.c.b16 %v351, %v349
        %v388 = vpack.c.b16 %v354, %v352
        %v389 = vpack.c.b16 %v355, %v353
        %v390 = vpack.c.b16 %v358, %v356
        %v391 = vpack.c.b16 %v359, %v357
        %424 = vmatprep.subr.bf16.mxu0 %v361
        %425 = vmatpush1.bf16.msra.mxu0 %v360
        %426 = vmatprep.subr.bf16.mxu0 %v363
        %427 = vmatpush1.bf16.msra.mxu0 %v362
        %428 = vmatprep.subr.bf16.mxu0 %v365
        %429 = vmatpush1.bf16.msra.mxu0 %v364
        %430 = vmatprep.subr.bf16.mxu0 %v367
        %431 = vmatpush1.bf16.msra.mxu0 %v366
        %432 = vmatprep.subr.bf16.mxu0 %v369
        %433 = vmatpush1.bf16.msra.mxu0 %v368
        %434 = vmatprep.subr.bf16.mxu0 %v371
        %435 = vmatpush1.bf16.msra.mxu0 %v370
        %436 = vmatprep.subr.bf16.mxu0 %v373
        %437 = vmatpush1.bf16.msra.mxu0 %v372
        %438 = vmatprep.subr.bf16.mxu0 %v375
        %439 = vmatpush1.bf16.msra.mxu0 %v374
        %440 = vmatprep.subr.bf16.mxu0 %v377
        %441 = vmatpush1.bf16.msra.mxu0 %v376
        %442 = vmatprep.subr.bf16.mxu0 %v379
        %443 = vmatpush1.bf16.msra.mxu0 %v378
        %444 = vmatprep.subr.bf16.mxu0 %v381
        %445 = vmatpush1.bf16.msra.mxu0 %v380
        %446 = vmatprep.subr.bf16.mxu0 %v383
        %447 = vmatpush1.bf16.msra.mxu0 %v382
        %448 = vmatprep.subr.bf16.mxu0 %v385
        %449 = vmatpush1.bf16.msra.mxu0 %v384
        %450 = vmatprep.subr.bf16.mxu0 %v387
        %451 = vmatpush1.bf16.msra.mxu0 %v386
        %452 = vmatprep.subr.bf16.mxu0 %v389
        %453 = vmatpush1.bf16.msra.mxu0 %v388
        %454 = vmatprep.subr.bf16.mxu0 %v391
        %455 = vmatpush1.bf16.msra.mxu0 %v390
        %456 = vmatprep.mubr.bf16.mxu0 %v218
        %457 = vmatmul.mubr.bf16.gmra.mrb[0].mxu0 %v214
        %v458 = vpop.f32.mrb[0].mxu0
        %v459 = vadd.f32 %v257, %v458
        %v460 = vpop.f32.mrb[0].mxu0
        %v461 = vadd.f32 %v261, %v460
        %v462 = vpop.f32.mrb[0].mxu0
        %v463 = vadd.f32 %v257, %v462
        %v464 = vpop.f32.mrb[0].mxu0
        %v465 = vadd.f32 %v261, %v464
        %466 = vdwg.mxu0
        %v467 = vmax.f32 %v459, 0.0
        %v468 = vmax.f32 %v461, 0.0
        %v469 = vmax.f32 %v463, 0.0
        %v470 = vmax.f32 %v465, 0.0
        %v471 = vpack.c.bf16 %v469, %v467
        %v472 = vpack.c.bf16 %v470, %v468
        %v475 = vunpack.c.l.b16 %v471
        %v476 = vunpack.c.l.b16 %v472
        %v477 = vunpack.c.h.b16 %v471
        %v478 = vunpack.c.h.b16 %v472
        %v479 = vpack.c.b16 %v476, %v475
        %v480 = vpack.c.b16 %v478, %v477
        %483 = vst [vmem:[%s178] sm:$0xff] %v479
        %484 = vst [vmem:[%s178 + $0x8] sm:$0xff] %v480
        %s485 = sand.u32 %s94, 1
        %s486 = scalar_lea.sflag [#allocation4], %s485
        %s487 = sand.u32 %s94, 1
        %s488 = smul.addr %s487, 16
        %s489 = scalar_lea.vmem [#allocation5], %s488
        // Predicated region
        $region37: #{tpu_custom_call.1} parent=31 // pred_check
          %p490 = pneg %p104
        $region38: #{tpu_custom_call.1} parent=31 // pred_check_branch
          %492 = sbr.rel (%p490) target = $region40
        $region39: #{tpu_custom_call.1} parent=31 // pred_region
          %s494 = ssub.s32 256, 256
          %495 = vsyncadd %s486, %s494
          %s496 = smul.addr %s18, 4
          %s497 = smul.addr %s496, 64
          %s498 = scalar_lea.hbm %s3, %s497
          %s499 = sshll.u32 %s489, 4
          %s500 = int_to_ptr.vmem [resolvable:$true] %s499
          %505 = dma.vmem_to_hbm [thread:$0]  %s500, 256, %s498, %s486, 128, 128, 8
        $region40: #{tpu_custom_call.1} parent=31 // pred_fallthru
          _
      $region32: #{tpu_custom_call.1} parent=5 // pred_fallthru
        _
      %p506 = scmp.le.s32.totalorder 2, %s13
      // Predicated region
      $region41: #{tpu_custom_call.1} parent=5 // pred_check
        %p507 = pneg %p506
      $region42: #{tpu_custom_call.1} parent=5 // pred_check_branch
        %509 = sbr.rel (%p507) target = $region44
      $region43: #{tpu_custom_call.1} parent=5 // pred_region
        %s510 = ssub.s32 %s13, 2
        // Predicated region
        $region45: #{tpu_custom_call.1} parent=43 // pred_check
          %p511 = pneg %p110
        $region46: #{tpu_custom_call.1} parent=43 // pred_check_branch
          %513 = sbr.rel (%p511) target = $region48
        $region47: #{tpu_custom_call.1} parent=43 // pred_region
          %s514 = sand.u32 %s95, 1
          %s515 = scalar_lea.sflag [#allocation4], %s514
          %s516 = sand.u32 %s95, 1
          %s517 = smul.addr %s516, 16
          %s518 = scalar_lea.vmem [#allocation5], %s517
          %519 = dma.done %s515, 256
        $region48: #{tpu_custom_call.1} parent=43 // pred_fallthru
          _
      $region44: #{tpu_custom_call.1} parent=5 // pred_fallthru
        _
    $region6: #{tpu_custom_call.1} parent=1 // loop_footer
      %s17 = sadd.s32 1, %s13
    $region7: #{tpu_custom_call.1} parent=1 // loop_footer_branch
      %12 = sbr.rel target = $region3
    $region8: #{tpu_custom_call.1} parent=1 // loop_exit
      _
    %520 = vsyncpa [#allocation3], 1
    %s521 = scalar_lea.sflag [#allocation3], 1
    %522 = vsyncpa %s521, 1
    %523 = vsyncpa [#allocation4], 1
    %s524 = scalar_lea.sflag [#allocation4], 1
    %525 = vsyncpa %s524, 1

</llo_original>
